<compile_context>
chip_gen: v5e
topology: v5e:2x2
jax: 0.10.0
libtpu: 0.0.40
codegen_flags: <defaults>
</compile_context>

<pallas_src>
import jax
import jax.numpy as jnp
from jax.experimental import pallas as pl
from jax.experimental.pallas import tpu as pltpu

NUM_OBJECT_QUERIES = 8   # small test size (module default is 100)
D_MODEL = 128            # lane-aligned d_model

# Below this output size the pallas_call launch overhead dwarfs the copy;
# let XLA fuse the broadcast into the consumer instead.
_SMALL_OUTPUT_BYTES = 1 << 20
# Hard per-buffer VMEM ceiling for one output tile.
_MAX_TILE_BYTES = 12 << 20


def _broadcast_queries_kernel(q_ref, o_ref):
    # q_ref: (Q, D) query table; constant index_map keeps it VMEM-resident
    #        across all grid steps (no re-DMA).
    # o_ref: (Q, tb, D) output tile; single dense sublane-broadcast store.
    q = q_ref[...]
    o_ref[...] = jnp.broadcast_to(q[:, None, :], o_ref.shape)


def _default_target_tile_bytes() -> int:
    """Generation-tuned output tile size (bigger tiles where HBM is faster)."""
    try:
        kind = jax.devices()[0].device_kind.lower()
    except Exception:  # pragma: no cover - defensive
        return 4 << 20
    if "v7" in kind:
        return 8 << 20   # ~3.2 TB/s HBM -> per-step overhead hurts more
    if "v5" in kind:
        return 2 << 20   # ~0.8 TB/s HBM -> 2 MiB already near roofline
    return 4 << 20       # v6e / default


def _dimension_semantics(num_tiles: int):
    """CORE_PARALLEL on multi-TC chips (v7x) so both cores share the stores."""
    try:
        kind = jax.devices()[0].device_kind.lower()
    except Exception:  # pragma: no cover - defensive
        kind = ""
    if "v7" in kind and num_tiles >= 2:
        return (pltpu.CORE_PARALLEL,)
    return ("parallel",)


def _pick_batch_tile(batch: int, row_bytes: int,
                     target_tile_bytes: int, max_tile_bytes: int) -> int:
    """Batch rows per output tile: large enough to amortize the ~0.35us per-step
    overhead, small enough that the output buffer ring fits in VMEM."""
    tb = max(1, target_tile_bytes // row_bytes)
    tb = min(tb, max(1, max_tile_bytes // row_bytes))
    if tb >= batch:
        return batch                      # single full-extent block (any batch)
    # Interior blocks need a sublane-aligned second-to-last dim; 32 covers
    # f32 / bf16 / int8 sublane packing.
    tb = max(32, (tb // 32) * 32)
    return min(tb, batch)


def object_query_embedding(queries: jax.Array, x: jax.Array,
                           *, use_pallas: bool | None = None,
                           target_tile_bytes: int | None = None) -> jax.Array:
    """Equivalent of ObjectQueryEmbedding.forward(x).

    queries: (num_queries, d_model)
    x:       (seq, batch, d_model) -- only batch = x.shape[1] is used
    returns: (num_queries, batch, d_model)
    """
    num_queries, d_model = queries.shape
    batch = x.shape[1]
    itemsize = jnp.dtype(queries.dtype).itemsize
    q_bytes = num_queries * d_model * itemsize
    row_bytes = q_bytes                       # one batch "row" of the output
    out_bytes = num_queries * batch * d_model * itemsize

    if use_pallas is None:
        # If the result feeds another XLA op, the fused broadcast costs zero
        # HBM writes; only materialize through Pallas for sizeable outputs.
        use_pallas = out_bytes >= _SMALL_OUTPUT_BYTES
    if d_model % 128 != 0:
        # TODO(synk): non-lane-aligned d_model would need padded lane tiles;
        # fall back to the fused XLA broadcast in that case.
        use_pallas = False
    if use_pallas and row_bytes * min(batch, 32) > _MAX_TILE_BYTES:
        # TODO(synk): extremely large Q*d_model would need a second tiling axis.
        use_pallas = False

    if not use_pallas:
        return jnp.broadcast_to(queries[:, None, :],
                                (num_queries, batch, d_model))

    if target_tile_bytes is None:
        target_tile_bytes = _default_target_tile_bytes()

    tb = _pick_batch_tile(batch, row_bytes, target_tile_bytes, _MAX_TILE_BYTES)
    num_tiles = pl.cdiv(batch, tb)
    tile_bytes = num_queries * tb * d_model * itemsize

    out_block = (num_queries, tb, d_model)
    out_index = lambda i: (0, i, 0)
    if num_tiles >= 3:
        # Compute per tile is ~zero; a 3-deep output ring keeps more writeback
        # DMAs in flight.
        out_buffers = 3
        out_spec = pl.BlockSpec(out_block, out_index,
                                pipeline_mode=pl.Buffered(out_buffers))
    else:
        out_buffers = 2
        out_spec = pl.BlockSpec(out_block, out_index)

    # Buffer ring + resident query table + margin; safe on all generations
    # (v7x physical VMEM is 64 MiB/TC).
    vmem_limit = int(min(48 << 20,
                         max(16 << 20,
                             out_buffers * tile_bytes + 2 * q_bytes + (4 << 20))))

    return pl.pallas_call(
        _broadcast_queries_kernel,
        out_shape=jax.ShapeDtypeStruct((num_queries, batch, d_model),
                                       queries.dtype),
        grid_spec=pl.GridSpec(
            grid=(num_tiles,),
            in_specs=[
                # Same block every step -> query table stays VMEM-resident.
                pl.BlockSpec((num_queries, d_model), lambda i: (0, 0)),
            ],
            out_specs=out_spec,
        ),
        compiler_params=pltpu.CompilerParams(
            dimension_semantics=_dimension_semantics(num_tiles),
            vmem_limit_bytes=vmem_limit,
        ),
        cost_estimate=pl.CostEstimate(
            flops=0, transcendentals=0,
            bytes_accessed=out_bytes + q_bytes),
    )(queries)


if __name__ == "__main__":
    key = jax.random.PRNGKey(0)
    k_q, k_x = jax.random.split(key)

    # Deterministic "parameter" init (torch.randn equivalent).
    queries = jax.random.normal(k_q, (NUM_OBJECT_QUERIES, D_MODEL),
                                dtype=jnp.float32)

    # Example input: (seq=16, batch=2, d_model=128); only batch is consumed.
    x = jax.random.normal(k_x, (16, 2, D_MODEL), dtype=jnp.float32)

    # Force the Pallas path at the small shape (single full-extent block).
    out = jax.block_until_ready(object_query_embedding(queries, x,
                                                       use_pallas=True))
    ref = jnp.broadcast_to(queries[:, None, :],
                           (NUM_OBJECT_QUERIES, x.shape[1], D_MODEL))
    assert out.shape == (NUM_OBJECT_QUERIES, x.shape[1], D_MODEL)
    assert jnp.array_equal(out, ref)

    # Multi-tile grid (forced small tiles -> grid of 3, Buffered(3) ring).
    x2 = jax.random.normal(k_x, (4, 96, D_MODEL), dtype=jnp.float32)
    out2 = jax.block_until_ready(
        object_query_embedding(queries, x2, use_pallas=True,
                               target_tile_bytes=64 << 10))
    ref2 = jnp.broadcast_to(queries[:, None, :],
                            (NUM_OBJECT_QUERIES, 96, D_MODEL))
    assert jnp.array_equal(out2, ref2)

    # Non-divisible batch: cdiv grid with a masked partial last block.
    x3 = jax.random.normal(k_x, (4, 100, D_MODEL), dtype=jnp.float32)
    out3 = jax.block_until_ready(
        object_query_embedding(queries, x3, use_pallas=True,
                               target_tile_bytes=64 << 10))
    ref3 = jnp.broadcast_to(queries[:, None, :],
                            (NUM_OBJECT_QUERIES, 100, D_MODEL))
    assert jnp.array_equal(out3, ref3)

    # Auto dispatch: tiny output -> fused XLA broadcast (no kernel launch).
    out4 = jax.block_until_ready(object_query_embedding(queries, x))
    assert jnp.array_equal(out4, ref)

    print("KERNEL_OK")
</pallas_src>

<mosaic_0001>
module attributes {stable_mosaic.version = 11 : i64} {
  func.func @_broadcast_queries_kernel(%arg0: i32, %arg1: memref<8x128xf32, #tpu.memory_space<vmem>>, %arg2: memref<8x2x128xf32, #tpu.memory_space<vmem>>) attributes {dimension_semantics = [#tpu.dimension_semantics<parallel>], iteration_bounds = array<i64: 1>, scalar_prefetch = 0 : i64, scratch_operands = 0 : i64, tpu.core_type = #tpu.core_type<tc>, window_params = [{pipeline_mode = #tpu.pipeline_mode<synchronous>, transform_indices = @transform_0, window_bounds = array<i64: 8, 128>}, {transform_indices = @transform_1, window_bounds = array<i64: 8, 2, 128>}]} {
    %c0 = arith.constant 0 : index
    %c0_0 = arith.constant 0 : index
    %0 = vector.load %arg1[%c0, %c0_0] : memref<8x128xf32, #tpu.memory_space<vmem>>, vector<8x128xf32>
    %1 = vector.shape_cast %0 : vector<8x128xf32> to vector<8x1x128xf32>
    %2 = vector.shape_cast %1 : vector<8x1x128xf32> to vector<8x1x128xf32>
    %3 = vector.broadcast %2 : vector<8x1x128xf32> to vector<8x2x128xf32>
    %c0_1 = arith.constant 0 : index
    %c0_2 = arith.constant 0 : index
    %c0_3 = arith.constant 0 : index
    %4 = vector.load %arg2[%c0_1, %c0_2, %c0_3] : memref<8x2x128xf32, #tpu.memory_space<vmem>>, vector<8x2x128xf32>
    tpu.vector_store %arg2[%c0_1, %c0_2, %c0_3], %3 {strides = array<i32>} : memref<8x2x128xf32, #tpu.memory_space<vmem>>, vector<8x2x128xf32>,
    return
  }
  func.func @transform_0(%arg0: i32) -> (i32, i32) {
    %c0_i32 = arith.constant 0 : i32
    %c0_i32_0 = arith.constant 0 : i32
    %c0_i32_1 = arith.constant 0 : i32
    return %c0_i32, %c0_i32_0 : i32, i32
  }
  func.func @transform_1(%arg0: i32) -> (i32, i32, i32) {
    %c0_i32 = arith.constant 0 : i32
    %c0_i32_0 = arith.constant 0 : i32
    %c0_i32_1 = arith.constant 0 : i32
    return %c0_i32, %arg0, %c0_i32_0 : i32, i32, i32
  }
}

</mosaic_0001>

<llo_original>
// kernel: tpu_custom_call.1
$region0: #{tpu_custom_call.1}
  #allocation0 [shape = 'u32[]', space=smem, size = 0x4, offset = 0x4, fixed_abs, tag = 'smem constant byte address 0x4 - core index']
  #allocation1 [shape = 'u32[72,128]{1,0:T(1,128)}', space=vmem, size = 0x9000, scoped, tag = 'internal scratch']
  %s0 = inlined_call_operand.hbm [shape: f32[8,128], index: 0, kind: input, shape index: {}]
  %s1 = inlined_call_operand.hbm [shape: f32[8,2,128], index: 1, kind: output, shape index: {}]
  %s2 = sld [smem:[#allocation0]]
  $region18: #{tpu_custom_call.1} parent=0
    _
  %s4 = ssub.s32 1, %s2
  %s5 = scalar_select 0, %s4, %s2
  $region1: #{tpu_custom_call.1} parent=0
    #allocation2 [shape = 'u8[4096]{0}', space=vmem, size = 0x1000, scoped, tag = 'input window, operand 0, single buffered']
    #allocation3 [shape = 's32[1]{0}', space=sflag, size = 0x4, scoped, tag = 'scoped memory for tpu_custom_call.1']
    #allocation4 [shape = 's32[1]{0}', space=sflag, size = 0x4, scoped, tag = 'scoped memory for tpu_custom_call.1']
    #allocation5 [shape = 'u8[8192]{0}', space=vmem, size = 0x2000, scoped, tag = 'output window, operand 0, single buffered']
    %6 = vsyncpa [#allocation3], 0
    %7 = vsyncpa [#allocation4], 0
    // Predicated region
    $region2: #{tpu_custom_call.1} parent=1 // pred_check
      _
    $region3: #{tpu_custom_call.1} parent=1 // pred_check_branch
      %9 = sbr.rel (0) target = $region5
    $region4: #{tpu_custom_call.1} parent=1 // pred_region
      %11 = vsyncadd [#allocation3], 0
      %s13 = sshll.u32 %s0, 4
      %s14 = int_to_ptr.hbm [resolvable:$true] %s13
      %s15 = sshll.u32 [#allocation2], 4
      %s16 = int_to_ptr.vmem [resolvable:$true] %s15
      %18 = dma.hbm_to_vmem [thread:$0]  %s14, 128, %s16, [#allocation3]
    $region5: #{tpu_custom_call.1} parent=1 // pred_fallthru
      _
    // Predicated region
    $region6: #{tpu_custom_call.1} parent=1 // pred_check
      _
    $region7: #{tpu_custom_call.1} parent=1 // pred_check_branch
      %20 = sbr.rel (0) target = $region9
    $region8: #{tpu_custom_call.1} parent=1 // pred_region
      %22 = dma.done [#allocation3], 128
    $region9: #{tpu_custom_call.1} parent=1 // pred_fallthru
      _
    %v23 = vld [vmem:[#allocation2] sm:$0xff]
    %v25 = vrot.slane %v23, 1
    %v26 = vrot.slane %v23, 2
    %v27 = vrot.slane %v23, 3
    %v28 = vrot.slane %v23, 4
    %v29 = vrot.slane %v23, 5
    %v30 = vrot.slane %v23, 6
    %v31 = vrot.slane %v23, 7
    %v32 = vperm.slane %v23, 0
    %v33 = vperm.slane %v25, 0
    %v34 = vperm.slane %v26, 0
    %v35 = vperm.slane %v27, 0
    %v36 = vperm.slane %v28, 0
    %v37 = vperm.slane %v29, 0
    %v38 = vperm.slane %v30, 0
    %v39 = vperm.slane %v31, 0
    %48 = vst [vmem:[#allocation5] sm:$0x3] %v32
    %49 = vst [vmem:[#allocation5 + $0x2] sm:$0x3] %v33
    %50 = vst [vmem:[#allocation5 + $0x4] sm:$0x3] %v34
    %51 = vst [vmem:[#allocation5 + $0x6] sm:$0x3] %v35
    %52 = vst [vmem:[#allocation5 + $0x8] sm:$0x3] %v36
    %53 = vst [vmem:[#allocation5 + $0xa] sm:$0x3] %v37
    %54 = vst [vmem:[#allocation5 + $0xc] sm:$0x3] %v38
    %55 = vst [vmem:[#allocation5 + $0xe] sm:$0x3] %v39
    // Predicated region
    $region10: #{tpu_custom_call.1} parent=1 // pred_check
      _
    $region11: #{tpu_custom_call.1} parent=1 // pred_check_branch
      %57 = sbr.rel (0) target = $region13
    $region12: #{tpu_custom_call.1} parent=1 // pred_region
      %59 = vsyncadd [#allocation4], 0
      %s60 = sshll.u32 [#allocation5], 4
      %s61 = int_to_ptr.vmem [resolvable:$true] %s60
      %s62 = sshll.u32 %s1, 4
      %s63 = int_to_ptr.hbm [resolvable:$true] %s62
      %68 = dma.vmem_to_hbm [thread:$0]  %s61, 256, %s63, [#allocation4], 32, 32, 2
    $region13: #{tpu_custom_call.1} parent=1 // pred_fallthru
      _
    // Predicated region
    $region14: #{tpu_custom_call.1} parent=1 // pred_check
      _
    $region15: #{tpu_custom_call.1} parent=1 // pred_check_branch
      %70 = sbr.rel (0) target = $region17
    $region16: #{tpu_custom_call.1} parent=1 // pred_region
      %72 = dma.done [#allocation4], 256
    $region17: #{tpu_custom_call.1} parent=1 // pred_fallthru
      _
    %73 = vsyncpa [#allocation3], 1
    %74 = vsyncpa [#allocation4], 1

</llo_original>
